<compile_context>
chip_gen: v7x
topology: tpu7x:2x2x1
jax: 0.10.0
libtpu: 0.0.40
codegen_flags: <defaults>
</compile_context>

<pallas_src>
import jax
import jax.numpy as jnp
from jax.experimental import pallas as pl
from jax.experimental.pallas import tpu as pltpu


def _snake_mlp_kernel(x_ref, w1_ref, wh_ref, w5_ref, b_ref, o_ref):
    """One batch tile of the full MLP.

    x_ref : (8, TILE_B)   input features, batch on lanes, stream dtype (bf16/f32)
    w1_ref: (16, 8)       layer-1 weight, torch (out, in) layout, stream dtype
    wh_ref: (3, 16, 16)   stacked hidden-layer weights (layers 2..4), stream dtype
    w5_ref: (8, 16)       output-layer weight zero-padded to 8 rows, stream dtype
    b_ref : (16, 5)       f32 biases as columns; col 4 rows 4..7 are -1e30 (pad mask)
    o_ref : (8, TILE_B)   f32 softmax probabilities (rows 4..7 are exactly 0)
    """
    cdt = w1_ref.dtype  # MXU operand dtype (bf16 by default; f32 fallback works too)
    x = x_ref[...]                                            # (8, TILE_B), cdt

    # Layer 1: h = W1 @ x + b1, ReLU.  MXU in cdt, accumulate f32.
    h = jnp.dot(w1_ref[...], x, preferred_element_type=jnp.float32)
    h = jnp.maximum(h + b_ref[:, 0:1], 0.0)                   # (16, TILE_B), f32 VPU

    # Layers 2..4 (unrolled; static slices of the stacked weights/biases).
    # Cast activations back to cdt so the dot really runs in bf16 on the MXU.
    for l in range(3):
        h = jnp.dot(wh_ref[l], h.astype(cdt), preferred_element_type=jnp.float32)
        h = jnp.maximum(h + b_ref[:, l + 1:l + 2], 0.0)       # (16, TILE_B), f32

    # Output layer, padded to 8 rows.  Padded rows: weight 0, bias -1e30.
    logits = jnp.dot(w5_ref[...], h.astype(cdt), preferred_element_type=jnp.float32)
    logits = logits + b_ref[0:8, 4:5]                         # (8, TILE_B), f32

    # Softmax over the feature axis (axis 0 == torch dim=1), stabilized.
    # Padded rows hold -1e30 -> exp == 0, so they don't perturb max/sum.
    m = jnp.max(logits, axis=0, keepdims=True)
    e = jnp.exp(logits - m)                                   # EUP
    s = jnp.sum(e, axis=0, keepdims=True)
    # Divide via approximate reciprocal on the (otherwise idle) EUP slot.
    o_ref[...] = (e * pl.reciprocal(s, approx=True)).astype(o_ref.dtype)


def _round_up(n: int, m: int) -> int:
    return ((n + m - 1) // m) * m


def snake_neural_net_forward(x, params, *, tile_b=8192, stream_dtype=jnp.bfloat16):
    """Forward pass of SnakeNeuralNet.

    x            : (B, ...) array whose trailing dims flatten to 8 features.
    params       : list of 5 (W, b) pairs in torch layout, W (out, in), b (out,).
    tile_b       : max batch tile (multiple of 128). Big tiles amortize per-step
                   overhead; VMEM use is trivial at these sizes.
    stream_dtype : dtype of streamed x / weights AND of the MXU operands.
                   bf16 (default) halves HBM traffic and halves the MXU push
                   count; elementwise math stays f32 regardless (v5e-safe).
                   Use jnp.float32 if exact-f32 matmul numerics are required.
    Returns (B, 4) float32 softmax probabilities (rows sum to 1 within ~1e-4
    relative, due to the approximate EUP reciprocal).
    """
    B = x.shape[0]
    x_flat = x.reshape(B, -1)                                 # nn.Flatten
    in_dim = x_flat.shape[1]                                  # 8

    # --- Pack parameters into a few small VMEM-resident operands -----------
    w1 = params[0][0].astype(stream_dtype)                                      # (16, 8)
    wh = jnp.stack([params[1][0], params[2][0], params[3][0]]).astype(stream_dtype)  # (3,16,16)
    w5 = jnp.zeros((8, 16), stream_dtype).at[:4, :].set(
        params[4][0].astype(stream_dtype))                                      # (8, 16), rows 4..7 zero
    b_packed = jnp.zeros((16, 5), jnp.float32)
    for l, (_, b) in enumerate(params):
        b_packed = b_packed.at[: b.shape[0], l].set(b.astype(jnp.float32))
    b_packed = b_packed.at[4:, 4].set(-1e30)   # mask padded logit rows out of the softmax

    # --- Tiling: batch on lanes; >=2 grid steps for large B (v7x megacore) --
    tile_cap = _round_up(pl.cdiv(B, 2), 128)
    tile = max(128, min(tile_b, tile_cap))
    b_pad = _round_up(B, tile)

    # Single fused cast + transpose + pad pass (pure layout plumbing).
    xt = jnp.pad(x_flat.astype(stream_dtype).T, ((0, 0), (0, b_pad - B)))       # (8, b_pad)

    grid = (b_pad // tile,)
    out_t = pl.pallas_call(
        _snake_mlp_kernel,
        out_shape=jax.ShapeDtypeStruct((8, b_pad), jnp.float32),
        grid_spec=pltpu.PrefetchScalarGridSpec(
            num_scalar_prefetch=0,
            grid=grid,
            in_specs=[
                pl.BlockSpec((in_dim, tile), lambda i: (0, i)),   # x tile (lane-dense, pipelined)
                pl.BlockSpec((16, in_dim), lambda i: (0, 0)),     # w1   (VMEM-resident)
                pl.BlockSpec((3, 16, 16), lambda i: (0, 0, 0)),   # stacked hidden weights
                pl.BlockSpec((8, 16), lambda i: (0, 0)),          # w5 (padded to 8 rows)
                pl.BlockSpec((16, 5), lambda i: (0, 0)),          # packed biases
            ],
            out_specs=pl.BlockSpec((8, tile), lambda i: (0, i)),  # full-sublane, lane-dense store
        ),
        compiler_params=pltpu.CompilerParams(
            dimension_semantics=("parallel",),   # shard batch tiles across TCs on v7x
        ),
    )(xt, w1, wh, w5, b_packed)

    # Back to torch layout (B, 4); drop feature padding and batch padding.
    return out_t[:4, :B].T


def init_params(key):
    """Deterministic init matching nn.Linear (torch layout: W (out,in), b (out,))."""
    layer_dims = [(8, 16), (16, 16), (16, 16), (16, 16), (16, 4)]
    params = []
    for i, (fan_in, fan_out) in enumerate(layer_dims):
        kw, kb = jax.random.split(jax.random.fold_in(key, i))
        bound = fan_in ** -0.5
        w = jax.random.uniform(kw, (fan_out, fan_in), jnp.float32, -bound, bound)
        b = jax.random.uniform(kb, (fan_out,), jnp.float32, -bound, bound)
        params.append((w, b))
    return params


def reference_forward(x, params):
    """Pure-JAX f32 reference matching the PyTorch module exactly."""
    h = x.reshape(x.shape[0], -1)
    n = len(params)
    for i, (w, b) in enumerate(params):
        h = h @ w.T + b
        if i < n - 1:
            h = jnp.maximum(h, 0.0)
    e = jnp.exp(h - jnp.max(h, axis=1, keepdims=True))
    return e / jnp.sum(e, axis=1, keepdims=True)


if __name__ == "__main__":
    key = jax.random.PRNGKey(0)
    kx, kp = jax.random.split(key)

    # Input consistent with Flatten -> Linear(8, 16): batch=2, 2x4 -> 8 features.
    x = jax.random.normal(kx, (2, 2, 4), jnp.float32)
    params = init_params(kp)
    ref = reference_forward(x, params)

    # 1) Exact-path check: f32 streaming, tight tolerance (only the approx
    #    EUP reciprocal differs from the pure-JAX reference).
    out_f32 = jax.block_until_ready(
        snake_neural_net_forward(x, params, stream_dtype=jnp.float32))
    assert out_f32.shape == (2, 4)
    assert bool(jnp.all(jnp.abs(jnp.sum(out_f32, axis=1) - 1.0) < 2e-3))
    assert bool(jnp.allclose(out_f32, ref, atol=2e-3, rtol=2e-3))

    # 2) Default fast path: bf16 MXU operands, f32 accumulate/elementwise.
    out = jax.block_until_ready(snake_neural_net_forward(x, params))
    assert out.shape == (2, 4)
    assert bool(jnp.all(jnp.abs(jnp.sum(out, axis=1) - 1.0) < 2e-3))
    # Looser tolerance covers bf16 operand rounding through 5 tiny layers.
    assert bool(jnp.allclose(out, ref, atol=1.5e-2, rtol=1.5e-2))

    print("KERNEL_OK")
</pallas_src>

<mosaic_0001>
module attributes {stable_mosaic.version = 11 : i64} {
  func.func @_snake_mlp_kernel(%arg0: i32, %arg1: memref<8x128xf32, #tpu.memory_space<vmem>>, %arg2: memref<16x8xf32, #tpu.memory_space<vmem>>, %arg3: memref<3x16x16xf32, #tpu.memory_space<vmem>>, %arg4: memref<8x16xf32, #tpu.memory_space<vmem>>, %arg5: memref<16x5xf32, #tpu.memory_space<vmem>>, %arg6: memref<8x128xf32, #tpu.memory_space<vmem>>) attributes {dimension_semantics = [#tpu.dimension_semantics<parallel>], iteration_bounds = array<i64: 1>, scalar_prefetch = 0 : i64, scratch_operands = 0 : i64, tpu.core_type = #tpu.core_type<tc>, window_params = [{transform_indices = @transform_0, window_bounds = array<i64: 8, 128>}, {pipeline_mode = #tpu.pipeline_mode<synchronous>, transform_indices = @transform_1, window_bounds = array<i64: 16, 8>}, {pipeline_mode = #tpu.pipeline_mode<synchronous>, transform_indices = @transform_2, window_bounds = array<i64: 3, 16, 16>}, {pipeline_mode = #tpu.pipeline_mode<synchronous>, transform_indices = @transform_3, window_bounds = array<i64: 8, 16>}, {pipeline_mode = #tpu.pipeline_mode<synchronous>, transform_indices = @transform_4, window_bounds = array<i64: 16, 5>}, {transform_indices = @transform_5, window_bounds = array<i64: 8, 128>}]} {
    %c0 = arith.constant 0 : index
    %c0_0 = arith.constant 0 : index
    %0 = vector.load %arg1[%c0, %c0_0] : memref<8x128xf32, #tpu.memory_space<vmem>>, vector<8x128xf32>
    %c0_1 = arith.constant 0 : index
    %c0_2 = arith.constant 0 : index
    %1 = vector.load %arg2[%c0_1, %c0_2] : memref<16x8xf32, #tpu.memory_space<vmem>>, vector<16x8xf32>
    %cst = arith.constant dense<0.000000e+00> : vector<16x128xf32>
    %2 = tpu.matmul %1, %0, %cst {dimension_numbers = #tpu.dot_dimension_numbers<[1], [0], [0], [1], [0, 0, 1, 1], [], []>} : vector<16x8xf32>, vector<8x128xf32>, vector<16x128xf32> -> vector<16x128xf32>
    %c0_3 = arith.constant 0 : index
    %c0_4 = arith.constant 0 : index
    %3 = vector.load %arg5[%c0_3, %c0_4] : memref<16x5xf32, #tpu.memory_space<vmem>>, vector<16x1xf32>
    %4 = vector.broadcast %3 : vector<16x1xf32> to vector<16x128xf32>
    %5 = arith.addf %2, %4 : vector<16x128xf32>
    %cst_5 = arith.constant 0.000000e+00 : f32
    %6 = vector.broadcast %cst_5 : f32 to vector<16x128xf32>
    %7 = arith.maximumf %5, %6 : vector<16x128xf32>
    %c0_6 = arith.constant 0 : index
    %c0_7 = arith.constant 0 : index
    %c0_8 = arith.constant 0 : index
    %8 = vector.load %arg3[%c0_6, %c0_7, %c0_8] : memref<3x16x16xf32, #tpu.memory_space<vmem>>, vector<1x16x16xf32>
    %9 = vector.shape_cast %8 : vector<1x16x16xf32> to vector<16x16xf32>
    %cst_9 = arith.constant dense<0.000000e+00> : vector<16x128xf32>
    %10 = tpu.matmul %9, %7, %cst_9 {dimension_numbers = #tpu.dot_dimension_numbers<[1], [0], [0], [1], [0, 0, 1, 1], [], []>} : vector<16x16xf32>, vector<16x128xf32>, vector<16x128xf32> -> vector<16x128xf32>
    %c0_10 = arith.constant 0 : index
    %c1 = arith.constant 1 : index
    %11 = vector.load %arg5[%c0_10, %c1] : memref<16x5xf32, #tpu.memory_space<vmem>>, vector<16x1xf32>
    %12 = vector.broadcast %11 : vector<16x1xf32> to vector<16x128xf32>
    %13 = arith.addf %10, %12 : vector<16x128xf32>
    %cst_11 = arith.constant 0.000000e+00 : f32
    %14 = vector.broadcast %cst_11 : f32 to vector<16x128xf32>
    %15 = arith.maximumf %13, %14 : vector<16x128xf32>
    %c1_12 = arith.constant 1 : index
    %c0_13 = arith.constant 0 : index
    %c0_14 = arith.constant 0 : index
    %16 = vector.load %arg3[%c1_12, %c0_13, %c0_14] : memref<3x16x16xf32, #tpu.memory_space<vmem>>, vector<1x16x16xf32>
    %17 = vector.shape_cast %16 : vector<1x16x16xf32> to vector<16x16xf32>
    %cst_15 = arith.constant dense<0.000000e+00> : vector<16x128xf32>
    %18 = tpu.matmul %17, %15, %cst_15 {dimension_numbers = #tpu.dot_dimension_numbers<[1], [0], [0], [1], [0, 0, 1, 1], [], []>} : vector<16x16xf32>, vector<16x128xf32>, vector<16x128xf32> -> vector<16x128xf32>
    %c0_16 = arith.constant 0 : index
    %c2 = arith.constant 2 : index
    %19 = vector.load %arg5[%c0_16, %c2] : memref<16x5xf32, #tpu.memory_space<vmem>>, vector<16x1xf32>
    %20 = vector.broadcast %19 : vector<16x1xf32> to vector<16x128xf32>
    %21 = arith.addf %18, %20 : vector<16x128xf32>
    %cst_17 = arith.constant 0.000000e+00 : f32
    %22 = vector.broadcast %cst_17 : f32 to vector<16x128xf32>
    %23 = arith.maximumf %21, %22 : vector<16x128xf32>
    %c2_18 = arith.constant 2 : index
    %c0_19 = arith.constant 0 : index
    %c0_20 = arith.constant 0 : index
    %24 = vector.load %arg3[%c2_18, %c0_19, %c0_20] : memref<3x16x16xf32, #tpu.memory_space<vmem>>, vector<1x16x16xf32>
    %25 = vector.shape_cast %24 : vector<1x16x16xf32> to vector<16x16xf32>
    %cst_21 = arith.constant dense<0.000000e+00> : vector<16x128xf32>
    %26 = tpu.matmul %25, %23, %cst_21 {dimension_numbers = #tpu.dot_dimension_numbers<[1], [0], [0], [1], [0, 0, 1, 1], [], []>} : vector<16x16xf32>, vector<16x128xf32>, vector<16x128xf32> -> vector<16x128xf32>
    %c0_22 = arith.constant 0 : index
    %c3 = arith.constant 3 : index
    %27 = vector.load %arg5[%c0_22, %c3] : memref<16x5xf32, #tpu.memory_space<vmem>>, vector<16x1xf32>
    %28 = vector.broadcast %27 : vector<16x1xf32> to vector<16x128xf32>
    %29 = arith.addf %26, %28 : vector<16x128xf32>
    %cst_23 = arith.constant 0.000000e+00 : f32
    %30 = vector.broadcast %cst_23 : f32 to vector<16x128xf32>
    %31 = arith.maximumf %29, %30 : vector<16x128xf32>
    %c0_24 = arith.constant 0 : index
    %c0_25 = arith.constant 0 : index
    %32 = vector.load %arg4[%c0_24, %c0_25] : memref<8x16xf32, #tpu.memory_space<vmem>>, vector<8x16xf32>
    %cst_26 = arith.constant dense<0.000000e+00> : vector<8x128xf32>
    %33 = tpu.matmul %32, %31, %cst_26 {dimension_numbers = #tpu.dot_dimension_numbers<[1], [0], [0], [1], [0, 0, 1, 1], [], []>} : vector<8x16xf32>, vector<16x128xf32>, vector<8x128xf32> -> vector<8x128xf32>
    %c0_27 = arith.constant 0 : index
    %c4 = arith.constant 4 : index
    %34 = vector.load %arg5[%c0_27, %c4] : memref<16x5xf32, #tpu.memory_space<vmem>>, vector<8x1xf32>
    %35 = vector.broadcast %34 : vector<8x1xf32> to vector<8x128xf32>
    %36 = arith.addf %33, %35 : vector<8x128xf32>
    %cst_28 = arith.constant dense<0xFF800000> : vector<128xf32>
    %37 = vector.multi_reduction <maximumf>, %36, %cst_28 [0] : vector<8x128xf32> to vector<128xf32>
    %38 = vector.shape_cast %37 : vector<128xf32> to vector<1x128xf32>
    %39 = vector.broadcast %38 : vector<1x128xf32> to vector<8x128xf32>
    %40 = arith.subf %36, %39 : vector<8x128xf32>
    %41 = math.exp %40 : vector<8x128xf32>
    %cst_29 = arith.constant dense<0.000000e+00> : vector<128xf32>
    %42 = vector.multi_reduction <add>, %41, %cst_29 [0] : vector<8x128xf32> to vector<128xf32>
    %43 = vector.shape_cast %42 : vector<128xf32> to vector<1x128xf32>
    %44 = tpu.reciprocal %43 {approx = true} : vector<1x128xf32> -> vector<1x128xf32>
    %45 = vector.broadcast %44 : vector<1x128xf32> to vector<8x128xf32>
    %46 = arith.mulf %41, %45 : vector<8x128xf32>
    %c0_30 = arith.constant 0 : index
    %c0_31 = arith.constant 0 : index
    %47 = vector.load %arg6[%c0_30, %c0_31] : memref<8x128xf32, #tpu.memory_space<vmem>>, vector<8x128xf32>
    tpu.vector_store %arg6[%c0_30, %c0_31], %46 {strides = array<i32>} : memref<8x128xf32, #tpu.memory_space<vmem>>, vector<8x128xf32>,
    return
  }
  func.func @transform_0(%arg0: i32) -> (i32, i32) {
    %c0_i32 = arith.constant 0 : i32
    %c0_i32_0 = arith.constant 0 : i32
    return %c0_i32, %arg0 : i32, i32
  }
  func.func @transform_1(%arg0: i32) -> (i32, i32) {
    %c0_i32 = arith.constant 0 : i32
    %c0_i32_0 = arith.constant 0 : i32
    %c0_i32_1 = arith.constant 0 : i32
    return %c0_i32, %c0_i32_0 : i32, i32
  }
  func.func @transform_2(%arg0: i32) -> (i32, i32, i32) {
    %c0_i32 = arith.constant 0 : i32
    %c0_i32_0 = arith.constant 0 : i32
    %c0_i32_1 = arith.constant 0 : i32
    %c0_i32_2 = arith.constant 0 : i32
    return %c0_i32, %c0_i32_0, %c0_i32_1 : i32, i32, i32
  }
  func.func @transform_3(%arg0: i32) -> (i32, i32) {
    %c0_i32 = arith.constant 0 : i32
    %c0_i32_0 = arith.constant 0 : i32
    %c0_i32_1 = arith.constant 0 : i32
    return %c0_i32, %c0_i32_0 : i32, i32
  }
  func.func @transform_4(%arg0: i32) -> (i32, i32) {
    %c0_i32 = arith.constant 0 : i32
    %c0_i32_0 = arith.constant 0 : i32
    %c0_i32_1 = arith.constant 0 : i32
    return %c0_i32, %c0_i32_0 : i32, i32
  }
  func.func @transform_5(%arg0: i32) -> (i32, i32) {
    %c0_i32 = arith.constant 0 : i32
    %c0_i32_0 = arith.constant 0 : i32
    return %c0_i32, %arg0 : i32, i32
  }
}

</mosaic_0001>

<llo_original>
// kernel: tpu_custom_call.1
$region0: #{tpu_custom_call.1}
  #allocation0 [shape = 'u32[]', space=smem, size = 0x4, offset = 0x4, fixed_abs, tag = 'smem constant byte address 0x4 - core index']
  #allocation1 [shape = 'u32[144,128]{1,0:T(1,128)}', space=vmem, size = 0x12000, scoped, tag = 'internal scratch']
  %s0 = inlined_call_operand.hbm [shape: f32[8,128], index: 0, kind: input, shape index: {}]
  %s1 = inlined_call_operand.vmem [shape: f32[16,8], index: 1, kind: input, shape index: {}]
  %s2 = inlined_call_operand.vmem [shape: f32[3,16,16], index: 2, kind: input, shape index: {}]
  %s3 = inlined_call_operand.hbm [shape: f32[8,16], index: 3, kind: input, shape index: {}]
  %s4 = inlined_call_operand.vmem [shape: f32[16,5], index: 4, kind: input, shape index: {}]
  %s5 = inlined_call_operand.hbm [shape: f32[8,128], index: 5, kind: output, shape index: {}]
  %s6 = sld [smem:[#allocation0]]
  $region38: #{tpu_custom_call.1} parent=0
    _
  %s8 = ssub.s32 1, %s6
  %s9 = scalar_select 0, %s8, %s6
  $region1: #{tpu_custom_call.1} parent=0
    #allocation2 [shape = 'u8[4096]{0}', space=vmem, size = 0x1000, scoped, tag = 'input window, operand 0, single buffered']
    #allocation3 [shape = 's32[1]{0}', space=sflag, size = 0x4, scoped, tag = 'scoped memory for tpu_custom_call.1']
    #allocation4 [shape = 's32[1]{0}', space=sflag, size = 0x4, scoped, tag = 'scoped memory for tpu_custom_call.1']
    #allocation5 [shape = 'u8[4096]{0}', space=vmem, size = 0x1000, scoped, tag = 'input window, operand 3, single buffered']
    #allocation6 [shape = 's32[1]{0}', space=sflag, size = 0x4, scoped, tag = 'scoped memory for tpu_custom_call.1']
    #allocation7 [shape = 'u8[4096]{0}', space=vmem, size = 0x1000, scoped, tag = 'output window, operand 0, single buffered']
    %10 = vsyncpa [#allocation3], 0
    %11 = vsyncpa [#allocation6], 0
    %12 = vsyncpa [#allocation4], 0
    // Predicated region
    $region2: #{tpu_custom_call.1} parent=1 // pred_check
      _
    $region3: #{tpu_custom_call.1} parent=1 // pred_check_branch
      %14 = sbr.rel (0) target = $region5
    $region4: #{tpu_custom_call.1} parent=1 // pred_region
      %s16 = ssub.s32 128, 128
      %17 = vsyncadd [#allocation3], %s16
      %s19 = sshll.u32 [#allocation2], 4
      %s20 = int_to_ptr.vmem [resolvable:$true] %s19
      %22 = dma.hbm_to_vmem [thread:$0]  %s0, 128, %s20, [#allocation3]
    $region5: #{tpu_custom_call.1} parent=1 // pred_fallthru
      _
    // Predicated region
    $region6: #{tpu_custom_call.1} parent=1 // pred_check
      _
    $region7: #{tpu_custom_call.1} parent=1 // pred_check_branch
      %24 = sbr.rel (0) target = $region9
    $region8: #{tpu_custom_call.1} parent=1 // pred_region
      _
    $region9: #{tpu_custom_call.1} parent=1 // pred_fallthru
      _
    // Predicated region
    $region10: #{tpu_custom_call.1} parent=1 // pred_check
      _
    $region11: #{tpu_custom_call.1} parent=1 // pred_check_branch
      %26 = sbr.rel (0) target = $region13
    $region12: #{tpu_custom_call.1} parent=1 // pred_region
      _
    $region13: #{tpu_custom_call.1} parent=1 // pred_fallthru
      _
    // Predicated region
    $region14: #{tpu_custom_call.1} parent=1 // pred_check
      _
    $region15: #{tpu_custom_call.1} parent=1 // pred_check_branch
      %28 = sbr.rel (0) target = $region17
    $region16: #{tpu_custom_call.1} parent=1 // pred_region
      %s30 = ssub.s32 128, 128
      %31 = vsyncadd [#allocation6], %s30
      %s33 = sshll.u32 [#allocation5], 4
      %s34 = int_to_ptr.vmem [resolvable:$true] %s33
      %36 = dma.hbm_to_vmem [thread:$0]  %s3, 128, %s34, [#allocation6]
    $region17: #{tpu_custom_call.1} parent=1 // pred_fallthru
      _
    // Predicated region
    $region18: #{tpu_custom_call.1} parent=1 // pred_check
      _
    $region19: #{tpu_custom_call.1} parent=1 // pred_check_branch
      %38 = sbr.rel (0) target = $region21
    $region20: #{tpu_custom_call.1} parent=1 // pred_region
      _
    $region21: #{tpu_custom_call.1} parent=1 // pred_fallthru
      _
    // Predicated region
    $region22: #{tpu_custom_call.1} parent=1 // pred_check
      _
    $region23: #{tpu_custom_call.1} parent=1 // pred_check_branch
      %40 = sbr.rel (0) target = $region25
    $region24: #{tpu_custom_call.1} parent=1 // pred_region
      %41 = dma.done [#allocation3], 128
    $region25: #{tpu_custom_call.1} parent=1 // pred_fallthru
      _
    // Predicated region
    $region26: #{tpu_custom_call.1} parent=1 // pred_check
      _
    $region27: #{tpu_custom_call.1} parent=1 // pred_check_branch
      %43 = sbr.rel (0) target = $region29
    $region28: #{tpu_custom_call.1} parent=1 // pred_region
      %44 = dma.done [#allocation6], 128
    $region29: #{tpu_custom_call.1} parent=1 // pred_fallthru
      _
    %v45 = vld [vmem:[#allocation2] sm:$0xff]
    %v46 = vld [vmem:[%s1] sm:$0xff]
    %v47 = vld [vmem:[%s1 + $0x8] sm:$0xff]
    %v48 = vld [vmem:[%s4] sm:$0xff]
    %v49 = vld [vmem:[%s4 + $0x8] sm:$0xff]
    %51 = vset.pattern.permute.xlu0 0
    %52 = vperm.xlu0 %51, %v48
    %v53 = vpop.permute.xlu0 %52
    %56 = vset.pattern.permute.xlu0 0
    %57 = vperm.xlu0 %56, %v49
    %v58 = vpop.permute.xlu0 %57
    %vm60 = vcmask 64512
    %v62 = vsel %vm60, %v46, 0
    %v65 = vsel %vm60, %v47, 0
    %67 = vmatprep.subr.mxu0 0.0
    %68 = vmatpush1.msra.mxu0 %v45
    %69 = vmatprep.subr.mxu0 0.0
    %70 = vmatpush1.msra.mxu0 0.0
    %71 = vmatprep.subr.mxu0 0.0
    %72 = vmatpush1.msra.mxu0 0.0
    %73 = vmatprep.subr.mxu0 0.0
    %74 = vmatpush1.msra.mxu0 0.0
    %75 = vmatprep.subr.mxu0 0.0
    %76 = vmatpush1.msra.mxu0 0.0
    %77 = vmatprep.subr.mxu0 0.0
    %78 = vmatpush1.msra.mxu0 0.0
    %79 = vmatprep.subr.mxu0 0.0
    %80 = vmatpush1.msra.mxu0 0.0
    %81 = vmatprep.subr.mxu0 0.0
    %82 = vmatpush1.msra.mxu0 0.0
    %83 = vmatprep.subr.mxu0 0.0
    %84 = vmatpush1.msra.mxu0 0.0
    %85 = vmatprep.subr.mxu0 0.0
    %86 = vmatpush1.msra.mxu0 0.0
    %87 = vmatprep.subr.mxu0 0.0
    %88 = vmatpush1.msra.mxu0 0.0
    %89 = vmatprep.subr.mxu0 0.0
    %90 = vmatpush1.msra.mxu0 0.0
    %91 = vmatprep.subr.mxu0 0.0
    %92 = vmatpush1.msra.mxu0 0.0
    %93 = vmatprep.subr.mxu0 0.0
    %94 = vmatpush1.msra.mxu0 0.0
    %95 = vmatprep.subr.mxu0 0.0
    %96 = vmatpush1.msra.mxu0 0.0
    %97 = vmatprep.subr.mxu0 0.0
    %98 = vmatpush1.msra.mxu0 0.0
    %99 = vmatprep.subr.mxu0 0.0
    %100 = vmatpush1.msra.mxu0 0.0
    %101 = vmatprep.subr.mxu0 0.0
    %102 = vmatpush1.msra.mxu0 0.0
    %103 = vmatprep.subr.mxu0 0.0
    %104 = vmatpush1.msra.mxu0 0.0
    %105 = vmatprep.subr.mxu0 0.0
    %106 = vmatpush1.msra.mxu0 0.0
    %107 = vmatprep.subr.mxu0 0.0
    %108 = vmatpush1.msra.mxu0 0.0
    %109 = vmatprep.subr.mxu0 0.0
    %110 = vmatpush1.msra.mxu0 0.0
    %111 = vmatprep.subr.mxu0 0.0
    %112 = vmatpush1.msra.mxu0 0.0
    %113 = vmatprep.subr.mxu0 0.0
    %114 = vmatpush1.msra.mxu0 0.0
    %115 = vmatprep.subr.mxu0 0.0
    %116 = vmatpush1.msra.mxu0 0.0
    %117 = vmatprep.subr.mxu0 0.0
    %118 = vmatpush1.msra.mxu0 0.0
    %119 = vmatprep.subr.mxu0 0.0
    %120 = vmatpush1.msra.mxu0 0.0
    %121 = vmatprep.subr.mxu0 0.0
    %122 = vmatpush1.msra.mxu0 0.0
    %123 = vmatprep.subr.mxu0 0.0
    %124 = vmatpush1.msra.mxu0 0.0
    %125 = vmatprep.subr.mxu0 0.0
    %126 = vmatpush1.msra.mxu0 0.0
    %127 = vmatprep.subr.mxu0 0.0
    %128 = vmatpush1.msra.mxu0 0.0
    %129 = vmatprep.subr.mxu0 0.0
    %130 = vmatpush1.msra.mxu0 0.0
    %131 = vmatprep.mubr.f32.mxu0 0.0
    %132 = vmatmul.mubr.f32.gmra.mrb[0].mxu0 %v62
    %v133 = vpop.f32.mrb[0].mxu0
    %v134 = vadd.f32 %v53, %v133
    %v135 = vpop.f32.mrb[0].mxu0
    %136 = vmatprep.mubr.f32.mxu0 0.0
    %137 = vmatmul.mubr.f32.gmra.mrb[0].mxu0 %v65
    %v138 = vpop.f32.mrb[0].mxu0
    %v139 = vadd.f32 %v58, %v138
    %v140 = vpop.f32.mrb[0].mxu0
    %141 = vdwg.mxu0
    %v142 = vmax.f32 %v134, 0.0
    %v143 = vmax.f32 %v139, 0.0
    %v144 = vld [vmem:[%s2] sm:$0xff]
    %v145 = vld [vmem:[%s2 + $0x8] sm:$0xff]
    %146 = vset.pattern.permute.xlu0 1
    %147 = vperm.xlu0 %146, %v48
    %v148 = vpop.permute.xlu0 %147
    %150 = vset.pattern.permute.xlu0 1
    %151 = vperm.xlu0 %150, %v49
    %v152 = vpop.permute.xlu0 %151
    %vm154 = vcmask 130048
    %v156 = vsel %vm154, %v144, 0
    %v159 = vsel %vm154, %v145, 0
    %161 = vmatprep.subr.mxu0 0.0
    %162 = vmatpush1.msra.mxu0 %v142
    %163 = vmatprep.subr.mxu0 0.0
    %164 = vmatpush1.msra.mxu0 %v143
    %165 = vmatprep.subr.mxu0 0.0
    %166 = vmatpush1.msra.mxu0 0.0
    %167 = vmatprep.subr.mxu0 0.0
    %168 = vmatpush1.msra.mxu0 0.0
    %169 = vmatprep.subr.mxu0 0.0
    %170 = vmatpush1.msra.mxu0 0.0
    %171 = vmatprep.subr.mxu0 0.0
    %172 = vmatpush1.msra.mxu0 0.0
    %173 = vmatprep.subr.mxu0 0.0
    %174 = vmatpush1.msra.mxu0 0.0
    %175 = vmatprep.subr.mxu0 0.0
    %176 = vmatpush1.msra.mxu0 0.0
    %177 = vmatprep.subr.mxu0 0.0
    %178 = vmatpush1.msra.mxu0 0.0
    %179 = vmatprep.subr.mxu0 0.0
    %180 = vmatpush1.msra.mxu0 0.0
    %181 = vmatprep.subr.mxu0 0.0
    %182 = vmatpush1.msra.mxu0 0.0
    %183 = vmatprep.subr.mxu0 0.0
    %184 = vmatpush1.msra.mxu0 0.0
    %185 = vmatprep.subr.mxu0 0.0
    %186 = vmatpush1.msra.mxu0 0.0
    %187 = vmatprep.subr.mxu0 0.0
    %188 = vmatpush1.msra.mxu0 0.0
    %189 = vmatprep.subr.mxu0 0.0
    %190 = vmatpush1.msra.mxu0 0.0
    %191 = vmatprep.subr.mxu0 0.0
    %192 = vmatpush1.msra.mxu0 0.0
    %193 = vmatprep.subr.mxu0 0.0
    %194 = vmatpush1.msra.mxu0 0.0
    %195 = vmatprep.subr.mxu0 0.0
    %196 = vmatpush1.msra.mxu0 0.0
    %197 = vmatprep.subr.mxu0 0.0
    %198 = vmatpush1.msra.mxu0 0.0
    %199 = vmatprep.subr.mxu0 0.0
    %200 = vmatpush1.msra.mxu0 0.0
    %201 = vmatprep.subr.mxu0 0.0
    %202 = vmatpush1.msra.mxu0 0.0
    %203 = vmatprep.subr.mxu0 0.0
    %204 = vmatpush1.msra.mxu0 0.0
    %205 = vmatprep.subr.mxu0 0.0
    %206 = vmatpush1.msra.mxu0 0.0
    %207 = vmatprep.subr.mxu0 0.0
    %208 = vmatpush1.msra.mxu0 0.0
    %209 = vmatprep.subr.mxu0 0.0
    %210 = vmatpush1.msra.mxu0 0.0
    %211 = vmatprep.subr.mxu0 0.0
    %212 = vmatpush1.msra.mxu0 0.0
    %213 = vmatprep.subr.mxu0 0.0
    %214 = vmatpush1.msra.mxu0 0.0
    %215 = vmatprep.subr.mxu0 0.0
    %216 = vmatpush1.msra.mxu0 0.0
    %217 = vmatprep.subr.mxu0 0.0
    %218 = vmatpush1.msra.mxu0 0.0
    %219 = vmatprep.subr.mxu0 0.0
    %220 = vmatpush1.msra.mxu0 0.0
    %221 = vmatprep.subr.mxu0 0.0
    %222 = vmatpush1.msra.mxu0 0.0
    %223 = vmatprep.subr.mxu0 0.0
    %224 = vmatpush1.msra.mxu0 0.0
    %225 = vmatprep.mubr.f32.mxu0 0.0
    %226 = vmatmul.mubr.f32.gmra.mrb[0].mxu0 %v156
    %v227 = vpop.f32.mrb[0].mxu0
    %v228 = vadd.f32 %v148, %v227
    %v229 = vpop.f32.mrb[0].mxu0
    %230 = vmatprep.mubr.f32.mxu0 0.0
    %231 = vmatmul.mubr.f32.gmra.mrb[0].mxu0 %v159
    %v232 = vpop.f32.mrb[0].mxu0
    %v233 = vadd.f32 %v152, %v232
    %v234 = vpop.f32.mrb[0].mxu0
    %235 = vdwg.mxu0
    %v236 = vmax.f32 %v228, 0.0
    %v237 = vmax.f32 %v233, 0.0
    %s238 = scalar_lea.vmem %s2, 16
    %v239 = vld [vmem:[%s238] sm:$0xff]
    %v240 = vld [vmem:[%s238 + $0x8] sm:$0xff]
    %241 = vset.pattern.permute.xlu0 2
    %242 = vperm.xlu0 %241, %v48
    %v243 = vpop.permute.xlu0 %242
    %245 = vset.pattern.permute.xlu0 2
    %246 = vperm.xlu0 %245, %v49
    %v247 = vpop.permute.xlu0 %246
    %v250 = vsel %vm154, %v239, 0
    %v253 = vsel %vm154, %v240, 0
    %255 = vmatprep.subr.mxu0 0.0
    %256 = vmatpush1.msra.mxu0 %v236
    %257 = vmatprep.subr.mxu0 0.0
    %258 = vmatpush1.msra.mxu0 %v237
    %259 = vmatprep.subr.mxu0 0.0
    %260 = vmatpush1.msra.mxu0 0.0
    %261 = vmatprep.subr.mxu0 0.0
    %262 = vmatpush1.msra.mxu0 0.0
    %263 = vmatprep.subr.mxu0 0.0
    %264 = vmatpush1.msra.mxu0 0.0
    %265 = vmatprep.subr.mxu0 0.0
    %266 = vmatpush1.msra.mxu0 0.0
    %267 = vmatprep.subr.mxu0 0.0
    %268 = vmatpush1.msra.mxu0 0.0
    %269 = vmatprep.subr.mxu0 0.0
    %270 = vmatpush1.msra.mxu0 0.0
    %271 = vmatprep.subr.mxu0 0.0
    %272 = vmatpush1.msra.mxu0 0.0
    %273 = vmatprep.subr.mxu0 0.0
    %274 = vmatpush1.msra.mxu0 0.0
    %275 = vmatprep.subr.mxu0 0.0
    %276 = vmatpush1.msra.mxu0 0.0
    %277 = vmatprep.subr.mxu0 0.0
    %278 = vmatpush1.msra.mxu0 0.0
    %279 = vmatprep.subr.mxu0 0.0
    %280 = vmatpush1.msra.mxu0 0.0
    %281 = vmatprep.subr.mxu0 0.0
    %282 = vmatpush1.msra.mxu0 0.0
    %283 = vmatprep.subr.mxu0 0.0
    %284 = vmatpush1.msra.mxu0 0.0
    %285 = vmatprep.subr.mxu0 0.0
    %286 = vmatpush1.msra.mxu0 0.0
    %287 = vmatprep.subr.mxu0 0.0
    %288 = vmatpush1.msra.mxu0 0.0
    %289 = vmatprep.subr.mxu0 0.0
    %290 = vmatpush1.msra.mxu0 0.0
    %291 = vmatprep.subr.mxu0 0.0
    %292 = vmatpush1.msra.mxu0 0.0
    %293 = vmatprep.subr.mxu0 0.0
    %294 = vmatpush1.msra.mxu0 0.0
    %295 = vmatprep.subr.mxu0 0.0
    %296 = vmatpush1.msra.mxu0 0.0
    %297 = vmatprep.subr.mxu0 0.0
    %298 = vmatpush1.msra.mxu0 0.0
    %299 = vmatprep.subr.mxu0 0.0
    %300 = vmatpush1.msra.mxu0 0.0
    %301 = vmatprep.subr.mxu0 0.0
    %302 = vmatpush1.msra.mxu0 0.0
    %303 = vmatprep.subr.mxu0 0.0
    %304 = vmatpush1.msra.mxu0 0.0
    %305 = vmatprep.subr.mxu0 0.0
    %306 = vmatpush1.msra.mxu0 0.0
    %307 = vmatprep.subr.mxu0 0.0
    %308 = vmatpush1.msra.mxu0 0.0
    %309 = vmatprep.subr.mxu0 0.0
    %310 = vmatpush1.msra.mxu0 0.0
    %311 = vmatprep.subr.mxu0 0.0
    %312 = vmatpush1.msra.mxu0 0.0
    %313 = vmatprep.subr.mxu0 0.0
    %314 = vmatpush1.msra.mxu0 0.0
    %315 = vmatprep.subr.mxu0 0.0
    %316 = vmatpush1.msra.mxu0 0.0
    %317 = vmatprep.subr.mxu0 0.0
    %318 = vmatpush1.msra.mxu0 0.0
    %319 = vmatprep.mubr.f32.mxu0 0.0
    %320 = vmatmul.mubr.f32.gmra.mrb[0].mxu0 %v250
    %v321 = vpop.f32.mrb[0].mxu0
    %v322 = vadd.f32 %v243, %v321
    %v323 = vpop.f32.mrb[0].mxu0
    %324 = vmatprep.mubr.f32.mxu0 0.0
    %325 = vmatmul.mubr.f32.gmra.mrb[0].mxu0 %v253
    %v326 = vpop.f32.mrb[0].mxu0
    %v327 = vadd.f32 %v247, %v326
    %v328 = vpop.f32.mrb[0].mxu0
    %329 = vdwg.mxu0
    %v330 = vmax.f32 %v322, 0.0
    %v331 = vmax.f32 %v327, 0.0
    %s332 = scalar_lea.vmem %s2, 32
    %v333 = vld [vmem:[%s332] sm:$0xff]
    %v334 = vld [vmem:[%s332 + $0x8] sm:$0xff]
    %335 = vset.pattern.permute.xlu0 3
    %336 = vperm.xlu0 %335, %v48
    %v337 = vpop.permute.xlu0 %336
    %339 = vset.pattern.permute.xlu0 3
    %340 = vperm.xlu0 %339, %v49
    %v341 = vpop.permute.xlu0 %340
    %v344 = vsel %vm154, %v333, 0
    %v347 = vsel %vm154, %v334, 0
    %349 = vmatprep.subr.mxu0 0.0
    %350 = vmatpush1.msra.mxu0 %v330
    %351 = vmatprep.subr.mxu0 0.0
    %352 = vmatpush1.msra.mxu0 %v331
    %353 = vmatprep.subr.mxu0 0.0
    %354 = vmatpush1.msra.mxu0 0.0
    %355 = vmatprep.subr.mxu0 0.0
    %356 = vmatpush1.msra.mxu0 0.0
    %357 = vmatprep.subr.mxu0 0.0
    %358 = vmatpush1.msra.mxu0 0.0
    %359 = vmatprep.subr.mxu0 0.0
    %360 = vmatpush1.msra.mxu0 0.0
    %361 = vmatprep.subr.mxu0 0.0
    %362 = vmatpush1.msra.mxu0 0.0
    %363 = vmatprep.subr.mxu0 0.0
    %364 = vmatpush1.msra.mxu0 0.0
    %365 = vmatprep.subr.mxu0 0.0
    %366 = vmatpush1.msra.mxu0 0.0
    %367 = vmatprep.subr.mxu0 0.0
    %368 = vmatpush1.msra.mxu0 0.0
    %369 = vmatprep.subr.mxu0 0.0
    %370 = vmatpush1.msra.mxu0 0.0
    %371 = vmatprep.subr.mxu0 0.0
    %372 = vmatpush1.msra.mxu0 0.0
    %373 = vmatprep.subr.mxu0 0.0
    %374 = vmatpush1.msra.mxu0 0.0
    %375 = vmatprep.subr.mxu0 0.0
    %376 = vmatpush1.msra.mxu0 0.0
    %377 = vmatprep.subr.mxu0 0.0
    %378 = vmatpush1.msra.mxu0 0.0
    %379 = vmatprep.subr.mxu0 0.0
    %380 = vmatpush1.msra.mxu0 0.0
    %381 = vmatprep.subr.mxu0 0.0
    %382 = vmatpush1.msra.mxu0 0.0
    %383 = vmatprep.subr.mxu0 0.0
    %384 = vmatpush1.msra.mxu0 0.0
    %385 = vmatprep.subr.mxu0 0.0
    %386 = vmatpush1.msra.mxu0 0.0
    %387 = vmatprep.subr.mxu0 0.0
    %388 = vmatpush1.msra.mxu0 0.0
    %389 = vmatprep.subr.mxu0 0.0
    %390 = vmatpush1.msra.mxu0 0.0
    %391 = vmatprep.subr.mxu0 0.0
    %392 = vmatpush1.msra.mxu0 0.0
    %393 = vmatprep.subr.mxu0 0.0
    %394 = vmatpush1.msra.mxu0 0.0
    %395 = vmatprep.subr.mxu0 0.0
    %396 = vmatpush1.msra.mxu0 0.0
    %397 = vmatprep.subr.mxu0 0.0
    %398 = vmatpush1.msra.mxu0 0.0
    %399 = vmatprep.subr.mxu0 0.0
    %400 = vmatpush1.msra.mxu0 0.0
    %401 = vmatprep.subr.mxu0 0.0
    %402 = vmatpush1.msra.mxu0 0.0
    %403 = vmatprep.subr.mxu0 0.0
    %404 = vmatpush1.msra.mxu0 0.0
    %405 = vmatprep.subr.mxu0 0.0
    %406 = vmatpush1.msra.mxu0 0.0
    %407 = vmatprep.subr.mxu0 0.0
    %408 = vmatpush1.msra.mxu0 0.0
    %409 = vmatprep.subr.mxu0 0.0
    %410 = vmatpush1.msra.mxu0 0.0
    %411 = vmatprep.subr.mxu0 0.0
    %412 = vmatpush1.msra.mxu0 0.0
    %413 = vmatprep.mubr.f32.mxu0 0.0
    %414 = vmatmul.mubr.f32.gmra.mrb[0].mxu0 %v344
    %v415 = vpop.f32.mrb[0].mxu0
    %v416 = vadd.f32 %v337, %v415
    %v417 = vpop.f32.mrb[0].mxu0
    %418 = vmatprep.mubr.f32.mxu0 0.0
    %419 = vmatmul.mubr.f32.gmra.mrb[0].mxu0 %v347
    %v420 = vpop.f32.mrb[0].mxu0
    %v421 = vadd.f32 %v341, %v420
    %v422 = vpop.f32.mrb[0].mxu0
    %423 = vdwg.mxu0
    %v424 = vmax.f32 %v416, 0.0
    %v425 = vmax.f32 %v421, 0.0
    %v426 = vld [vmem:[#allocation5] sm:$0xff]
    %v427 = vld [vmem:[%s4] sm:$0xff]
    %429 = vset.pattern.permute.xlu0 4
    %430 = vperm.xlu0 %429, %v427
    %v431 = vpop.permute.xlu0 %430
    %v434 = vsel %vm154, %v426, 0
    %436 = vmatprep.subr.mxu0 0.0
    %437 = vmatpush1.msra.mxu0 %v424
    %438 = vmatprep.subr.mxu0 0.0
    %439 = vmatpush1.msra.mxu0 %v425
    %440 = vmatprep.subr.mxu0 0.0
    %441 = vmatpush1.msra.mxu0 0.0
    %442 = vmatprep.subr.mxu0 0.0
    %443 = vmatpush1.msra.mxu0 0.0
    %444 = vmatprep.subr.mxu0 0.0
    %445 = vmatpush1.msra.mxu0 0.0
    %446 = vmatprep.subr.mxu0 0.0
    %447 = vmatpush1.msra.mxu0 0.0
    %448 = vmatprep.subr.mxu0 0.0
    %449 = vmatpush1.msra.mxu0 0.0
    %450 = vmatprep.subr.mxu0 0.0
    %451 = vmatpush1.msra.mxu0 0.0
    %452 = vmatprep.subr.mxu0 0.0
    %453 = vmatpush1.msra.mxu0 0.0
    %454 = vmatprep.subr.mxu0 0.0
    %455 = vmatpush1.msra.mxu0 0.0
    %456 = vmatprep.subr.mxu0 0.0
    %457 = vmatpush1.msra.mxu0 0.0
    %458 = vmatprep.subr.mxu0 0.0
    %459 = vmatpush1.msra.mxu0 0.0
    %460 = vmatprep.subr.mxu0 0.0
    %461 = vmatpush1.msra.mxu0 0.0
    %462 = vmatprep.subr.mxu0 0.0
    %463 = vmatpush1.msra.mxu0 0.0
    %464 = vmatprep.subr.mxu0 0.0
    %465 = vmatpush1.msra.mxu0 0.0
    %466 = vmatprep.subr.mxu0 0.0
    %467 = vmatpush1.msra.mxu0 0.0
    %468 = vmatprep.subr.mxu0 0.0
    %469 = vmatpush1.msra.mxu0 0.0
    %470 = vmatprep.subr.mxu0 0.0
    %471 = vmatpush1.msra.mxu0 0.0
    %472 = vmatprep.subr.mxu0 0.0
    %473 = vmatpush1.msra.mxu0 0.0
    %474 = vmatprep.subr.mxu0 0.0
    %475 = vmatpush1.msra.mxu0 0.0
    %476 = vmatprep.subr.mxu0 0.0
    %477 = vmatpush1.msra.mxu0 0.0
    %478 = vmatprep.subr.mxu0 0.0
    %479 = vmatpush1.msra.mxu0 0.0
    %480 = vmatprep.subr.mxu0 0.0
    %481 = vmatpush1.msra.mxu0 0.0
    %482 = vmatprep.subr.mxu0 0.0
    %483 = vmatpush1.msra.mxu0 0.0
    %484 = vmatprep.subr.mxu0 0.0
    %485 = vmatpush1.msra.mxu0 0.0
    %486 = vmatprep.subr.mxu0 0.0
    %487 = vmatpush1.msra.mxu0 0.0
    %488 = vmatprep.subr.mxu0 0.0
    %489 = vmatpush1.msra.mxu0 0.0
    %490 = vmatprep.subr.mxu0 0.0
    %491 = vmatpush1.msra.mxu0 0.0
    %492 = vmatprep.subr.mxu0 0.0
    %493 = vmatpush1.msra.mxu0 0.0
    %494 = vmatprep.subr.mxu0 0.0
    %495 = vmatpush1.msra.mxu0 0.0
    %496 = vmatprep.subr.mxu0 0.0
    %497 = vmatpush1.msra.mxu0 0.0
    %498 = vmatprep.subr.mxu0 0.0
    %499 = vmatpush1.msra.mxu0 0.0
    %500 = vmatprep.mubr.f32.mxu0 0.0
    %501 = vmatmul.mubr.f32.gmra.mrb[0].mxu0 %v434
    %v502 = vpop.f32.mrb[0].mxu0
    %v503 = vadd.f32 %v431, %v502
    %v504 = vpop.f32.mrb[0].mxu0
    %505 = vdwg.mxu0
    %v506 = vrot.slane %v503, 4
    %v507 = vmax.f32 %v503, %v506
    %v508 = vrot.slane %v507, 2
    %v509 = vmax.f32 %v507, %v508
    %v510 = vrot.slane %v509, 1
    %v511 = vmax.f32 %v509, %v510
    %v512 = vsub.f32 %v503, %v511
    %v513 = vmul.f32 %v512, 1.442695
    %v514 = vpow.pop %v513
    %v515 = vrot.slane %v514, 4
    %v516 = vadd.f32 %v514, %v515
    %v517 = vrot.slane %v516, 2
    %v518 = vadd.f32 %v516, %v517
    %v519 = vrot.slane %v518, 1
    %v520 = vadd.f32 %v518, %v519
    %v521 = vrcp.pop %v520
    %v522 = vmul.f32 %v514, %v521
    %523 = vst [vmem:[#allocation7] sm:$0xff] %v522
    // Predicated region
    $region30: #{tpu_custom_call.1} parent=1 // pred_check
      _
    $region31: #{tpu_custom_call.1} parent=1 // pred_check_branch
      %525 = sbr.rel (0) target = $region33
    $region32: #{tpu_custom_call.1} parent=1 // pred_region
      %s527 = ssub.s32 128, 128
      %528 = vsyncadd [#allocation4], %s527
      %s530 = sshll.u32 [#allocation7], 4
      %s531 = int_to_ptr.vmem [resolvable:$true] %s530
      %533 = dma.vmem_to_hbm [thread:$0]  %s531, 128, %s5, [#allocation4]
    $region33: #{tpu_custom_call.1} parent=1 // pred_fallthru
      _
    // Predicated region
    $region34: #{tpu_custom_call.1} parent=1 // pred_check
      _
    $region35: #{tpu_custom_call.1} parent=1 // pred_check_branch
      %535 = sbr.rel (0) target = $region37
    $region36: #{tpu_custom_call.1} parent=1 // pred_region
      %536 = dma.done [#allocation4], 128
    $region37: #{tpu_custom_call.1} parent=1 // pred_fallthru
      _
    %537 = vsyncpa [#allocation3], 1
    %538 = vsyncpa [#allocation6], 1
    %539 = vsyncpa [#allocation4], 1

</llo_original>
